<compile_context>
chip_gen: v5e
topology: v5e:2x2
jax: 0.10.0
libtpu: 0.0.40
codegen_flags: <defaults>
</compile_context>

<pallas_src>
import functools

import jax
import jax.numpy as jnp
from jax.experimental import pallas as pl
from jax.experimental.pallas import tpu as pltpu

LANE = 128
SUBLANE = 8
DEFAULT_TILE_N = 1024
NEG_MASK = -1e30  # plain Python float (never captured as a jnp constant)


def _round_up(v: int, m: int) -> int:
    return ((v + m - 1) // m) * m


def _resident_spec(block_shape):
    """Block with a constant index_map (stays VMEM-resident across the grid).

    Single-buffered when the installed JAX supports pipeline_mode; falls back
    to the default (double-buffered) BlockSpec otherwise.
    """
    if hasattr(pl, "Buffered"):
        try:
            return pl.BlockSpec(block_shape, lambda i: (0, 0),
                                pipeline_mode=pl.Buffered(1))
        except TypeError:
            pass
    return pl.BlockSpec(block_shape, lambda i: (0, 0))


def _make_mlp_kernel(num_layers: int):
    """Fused MLP kernel: all Linear+ReLU layers + log_softmax in one body."""

    def kernel(*refs):
        # refs = (x_ref, w0, b0, ..., w_{L-1}, b_{L-1}, mask_ref, o_ref)
        x_ref = refs[0]
        o_ref = refs[-1]
        mask_ref = refs[-2]
        wb = refs[1:-2]

        h = x_ref[...]  # f32 [tile_n, c_in]
        for l in range(num_layers):
            w = wb[2 * l][...]        # bf16 [in_pad_l, out_pad_l], VMEM-resident
            b = wb[2 * l + 1][...]    # f32  [1, out_pad_l]
            # bf16 MXU operands, f32 accumulation.
            h = jnp.dot(h.astype(w.dtype), w,
                        preferred_element_type=jnp.float32) + b
            h = jnp.maximum(h, 0.0)   # ReLU after every layer (matches reference)
            # dropout: identity (eval mode)

        # Additive mask: 0 for real classes, -1e30 for padded logit columns,
        # so the softmax normalizer only sums the real classes.
        h = h + mask_ref[...]

        # Numerically-stable log_softmax over the feature axis (PyTorch dim=1).
        m = jnp.max(h, axis=-1, keepdims=True)
        s = h - m
        lse = jnp.log(jnp.sum(jnp.exp(s), axis=-1, keepdims=True))
        o_ref[...] = (s - lse).astype(o_ref.dtype)

    return kernel


def prepare_params(weights, biases, c_in):
    """One-time parameter prep (call OUTSIDE the per-step forward):

    pads every layer's output (lane) dim to a multiple of 128, casts weights
    to bf16 (MXU operands, half the HBM weight traffic), keeps biases f32,
    and builds the additive logit mask for the padded class columns.
    """
    num_layers = len(weights)
    in_dims = [w.shape[0] for w in weights]
    out_dims = [w.shape[1] for w in weights]
    out_pads = [_round_up(d, LANE) for d in out_dims]
    in_pads = [c_in] + out_pads[:-1]   # layer l>0 consumes layer l-1's padded out

    w_p, b_p = [], []
    for l in range(num_layers):
        wl = jnp.pad(jnp.asarray(weights[l], jnp.float32),
                     ((0, in_pads[l] - in_dims[l]),
                      (0, out_pads[l] - out_dims[l])))
        bl = jnp.pad(jnp.asarray(biases[l], jnp.float32),
                     ((0, 0), (0, out_pads[l] - out_dims[l])))
        w_p.append(wl.astype(jnp.bfloat16))
        b_p.append(bl)

    c_out = out_dims[-1]
    c_out_pad = out_pads[-1]
    col = jnp.arange(c_out_pad, dtype=jnp.int32)
    logit_mask = jnp.where(col < c_out, 0.0, NEG_MASK)
    logit_mask = logit_mask.astype(jnp.float32).reshape(1, c_out_pad)

    return tuple(w_p), tuple(b_p), logit_mask, c_out


@functools.partial(jax.jit, static_argnames=("c_out",))
def mlp_forward(x, weights_p, biases_p, logit_mask, *, c_out):
    """
    x:          [N, c_in] float32
    weights_p:  tuple of padded bf16 [in_pad_l, out_pad_l] (from prepare_params)
    biases_p:   tuple of padded f32  [1, out_pad_l]
    logit_mask: [1, c_out_pad] f32 additive mask
    returns:    [N, c_out] log-probabilities (float32)
    """
    num_layers = len(weights_p)
    n, c_in = x.shape
    in_pads = [w.shape[0] for w in weights_p]
    out_pads = [w.shape[1] for w in weights_p]
    c_out_pad = out_pads[-1]

    # ---- row tiling / grid --------------------------------------------------
    # Big tiles (HBM-bound), but keep >=2 grid steps so the "parallel" row
    # axis can shard across both TensorCores on v7x.
    half_rows = _round_up(max((n + 1) // 2, SUBLANE), SUBLANE)
    tile_n = min(DEFAULT_TILE_N, half_rows)
    n_pad = _round_up(n, tile_n)

    x = x.astype(jnp.float32)
    if n_pad != n:
        x = jnp.pad(x, ((0, n_pad - n), (0, 0)))

    grid = (n_pad // tile_n,)

    in_specs = [pl.BlockSpec((tile_n, c_in), lambda i: (i, 0))]
    for l in range(num_layers):
        in_specs.append(_resident_spec((in_pads[l], out_pads[l])))
        in_specs.append(_resident_spec((1, out_pads[l])))
    in_specs.append(_resident_spec((1, c_out_pad)))
    out_specs = pl.BlockSpec((tile_n, c_out_pad), lambda i: (i, 0))

    # ---- VMEM budget (bytes): resident params + double-buffered x/out tiles
    vmem_bytes = (
        sum(ip * op * 2 for ip, op in zip(in_pads, out_pads))   # bf16 weights
        + sum(op * 4 for op in out_pads) + c_out_pad * 4        # biases + mask
        + 2 * tile_n * c_in * 4                                 # x tiles (x2 buf)
        + 2 * tile_n * c_out_pad * 4                            # out tiles (x2 buf)
        + 2 * tile_n * max(out_pads) * 4                        # f32 intermediates
    )
    vmem_limit = int(min(max(2 * vmem_bytes + (8 << 20), 32 << 20), 64 << 20))

    kernel = _make_mlp_kernel(num_layers)

    args = [x]
    for w, b in zip(weights_p, biases_p):
        args.extend((w, b))
    args.append(logit_mask)

    out_p = pl.pallas_call(
        kernel,
        out_shape=jax.ShapeDtypeStruct((n_pad, c_out_pad), jnp.float32),
        grid=grid,
        in_specs=in_specs,
        out_specs=out_specs,
        compiler_params=pltpu.CompilerParams(
            dimension_semantics=("parallel",),   # row axis: megacore-shardable
            vmem_limit_bytes=vmem_limit),
    )(*args)

    # Strip row padding and padded logit columns (skip if nothing was padded).
    if n_pad == n and c_out_pad == c_out:
        return out_p
    return out_p[:n, :c_out]


def init_params(key, c_in, c_hidden, c_out, num_layers):
    """Deterministic parameter init matching the module's layer shapes."""
    dims_in = [c_in] + [c_hidden] * (num_layers - 1)
    dims_out = [c_hidden] * (num_layers - 1) + [c_out]
    weights, biases = [], []
    for di, do in zip(dims_in, dims_out):
        key, kw, kb = jax.random.split(key, 3)
        bound = 1.0 / jnp.sqrt(di)
        # stored as [in, out] (transpose of PyTorch's [out, in])
        w = jax.random.uniform(kw, (di, do), jnp.float32, -bound, bound)
        b = jax.random.uniform(kb, (1, do), jnp.float32, -bound, bound)
        weights.append(w)
        biases.append(b)
    return tuple(weights), tuple(biases)


def reference_forward(x, weights, biases, matmul_dtype=jnp.float32):
    """Plain-JAX reference; matmul_dtype=bfloat16 mirrors the kernel's MXU path."""
    h = x.astype(jnp.float32)
    for w, b in zip(weights, biases):
        h = jnp.dot(h.astype(matmul_dtype), w.astype(matmul_dtype),
                    preferred_element_type=jnp.float32) + b.astype(jnp.float32)
        h = jnp.maximum(h, 0.0)
    return jax.nn.log_softmax(h, axis=1)


if __name__ == "__main__":
    # MLP(c_in=16, c_hidden=32, c_out=8, num_layers=3, dp_rate=0.1)
    # N=300 exercises row padding (300 -> 2 x 152) and a multi-step grid.
    N, C_IN, C_HIDDEN, C_OUT, NUM_LAYERS = 300, 16, 32, 8, 3

    key = jax.random.PRNGKey(0)
    key, kx = jax.random.split(key)
    x = jax.random.normal(kx, (N, C_IN), dtype=jnp.float32)

    weights, biases = init_params(key, C_IN, C_HIDDEN, C_OUT, NUM_LAYERS)

    # One-time parameter prep (hoisted out of the per-call forward).
    w_p, b_p, logit_mask, c_out = prepare_params(weights, biases, C_IN)

    out = mlp_forward(x, w_p, b_p, logit_mask, c_out=c_out)
    out = jax.block_until_ready(out)

    assert out.shape == (N, C_OUT)
    assert bool(jnp.all(jnp.isfinite(out)))

    # Tight check against a reference that uses the same bf16 matmul operands.
    ref_bf16 = reference_forward(x, weights, biases, matmul_dtype=jnp.bfloat16)
    assert jnp.allclose(out, ref_bf16, atol=2e-3, rtol=2e-3), \
        float(jnp.max(jnp.abs(out - ref_bf16)))

    # Loose check against the pure-f32 reference (bf16 rounding only).
    ref_f32 = reference_forward(x, weights, biases, matmul_dtype=jnp.float32)
    assert jnp.allclose(out, ref_f32, atol=1e-1, rtol=1e-1), \
        float(jnp.max(jnp.abs(out - ref_f32)))

    print("KERNEL_OK")
</pallas_src>

<mosaic_0001>
module attributes {stable_mosaic.version = 11 : i64} {
  func.func @kernel(%arg0: i32, %arg1: memref<152x16xf32, #tpu.memory_space<vmem>>, %arg2: memref<16x128xbf16, #tpu.memory_space<vmem>>, %arg3: memref<1x128xf32, #tpu.memory_space<vmem>>, %arg4: memref<128x128xbf16, #tpu.memory_space<vmem>>, %arg5: memref<1x128xf32, #tpu.memory_space<vmem>>, %arg6: memref<128x128xbf16, #tpu.memory_space<vmem>>, %arg7: memref<1x128xf32, #tpu.memory_space<vmem>>, %arg8: memref<1x128xf32, #tpu.memory_space<vmem>>, %arg9: memref<152x128xf32, #tpu.memory_space<vmem>>) attributes {dimension_semantics = [#tpu.dimension_semantics<parallel>], iteration_bounds = array<i64: 2>, scalar_prefetch = 0 : i64, scratch_operands = 0 : i64, tpu.core_type = #tpu.core_type<tc>, window_params = [{transform_indices = @transform_0, window_bounds = array<i64: 152, 16>}, {pipeline_mode = #tpu.pipeline_mode<synchronous>, transform_indices = @transform_1, window_bounds = array<i64: 16, 128>}, {pipeline_mode = #tpu.pipeline_mode<synchronous>, transform_indices = @transform_2, window_bounds = array<i64: 1, 128>}, {pipeline_mode = #tpu.pipeline_mode<synchronous>, transform_indices = @transform_3, window_bounds = array<i64: 128, 128>}, {pipeline_mode = #tpu.pipeline_mode<synchronous>, transform_indices = @transform_4, window_bounds = array<i64: 1, 128>}, {pipeline_mode = #tpu.pipeline_mode<synchronous>, transform_indices = @transform_5, window_bounds = array<i64: 128, 128>}, {pipeline_mode = #tpu.pipeline_mode<synchronous>, transform_indices = @transform_6, window_bounds = array<i64: 1, 128>}, {pipeline_mode = #tpu.pipeline_mode<synchronous>, transform_indices = @transform_7, window_bounds = array<i64: 1, 128>}, {transform_indices = @transform_8, window_bounds = array<i64: 152, 128>}]} {
    %c0 = arith.constant 0 : index
    %c0_0 = arith.constant 0 : index
    %0 = vector.load %arg1[%c0, %c0_0] : memref<152x16xf32, #tpu.memory_space<vmem>>, vector<152x16xf32>
    %c0_1 = arith.constant 0 : index
    %c0_2 = arith.constant 0 : index
    %1 = vector.load %arg2[%c0_1, %c0_2] : memref<16x128xbf16, #tpu.memory_space<vmem>>, vector<16x128xbf16>
    %c0_3 = arith.constant 0 : index
    %c0_4 = arith.constant 0 : index
    %2 = vector.load %arg3[%c0_3, %c0_4] : memref<1x128xf32, #tpu.memory_space<vmem>>, vector<1x128xf32>
    %3 = arith.truncf %0 : vector<152x16xf32> to vector<152x16xbf16>
    %cst = arith.constant dense<0.000000e+00> : vector<152x128xf32>
    %4 = tpu.matmul %3, %1, %cst {dimension_numbers = #tpu.dot_dimension_numbers<[1], [0], [0], [1], [0, 0, 1, 1], [], []>} : vector<152x16xbf16>, vector<16x128xbf16>, vector<152x128xf32> -> vector<152x128xf32>
    %5 = vector.broadcast %2 : vector<1x128xf32> to vector<152x128xf32>
    %6 = arith.addf %4, %5 : vector<152x128xf32>
    %cst_5 = arith.constant 0.000000e+00 : f32
    %7 = vector.broadcast %cst_5 : f32 to vector<152x128xf32>
    %8 = arith.maximumf %6, %7 : vector<152x128xf32>
    %c0_6 = arith.constant 0 : index
    %c0_7 = arith.constant 0 : index
    %9 = vector.load %arg4[%c0_6, %c0_7] : memref<128x128xbf16, #tpu.memory_space<vmem>>, vector<128x128xbf16>
    %c0_8 = arith.constant 0 : index
    %c0_9 = arith.constant 0 : index
    %10 = vector.load %arg5[%c0_8, %c0_9] : memref<1x128xf32, #tpu.memory_space<vmem>>, vector<1x128xf32>
    %11 = arith.truncf %8 : vector<152x128xf32> to vector<152x128xbf16>
    %cst_10 = arith.constant dense<0.000000e+00> : vector<152x128xf32>
    %12 = tpu.matmul %11, %9, %cst_10 {dimension_numbers = #tpu.dot_dimension_numbers<[1], [0], [0], [1], [0, 0, 1, 1], [], []>} : vector<152x128xbf16>, vector<128x128xbf16>, vector<152x128xf32> -> vector<152x128xf32>
    %13 = vector.broadcast %10 : vector<1x128xf32> to vector<152x128xf32>
    %14 = arith.addf %12, %13 : vector<152x128xf32>
    %cst_11 = arith.constant 0.000000e+00 : f32
    %15 = vector.broadcast %cst_11 : f32 to vector<152x128xf32>
    %16 = arith.maximumf %14, %15 : vector<152x128xf32>
    %c0_12 = arith.constant 0 : index
    %c0_13 = arith.constant 0 : index
    %17 = vector.load %arg6[%c0_12, %c0_13] : memref<128x128xbf16, #tpu.memory_space<vmem>>, vector<128x128xbf16>
    %c0_14 = arith.constant 0 : index
    %c0_15 = arith.constant 0 : index
    %18 = vector.load %arg7[%c0_14, %c0_15] : memref<1x128xf32, #tpu.memory_space<vmem>>, vector<1x128xf32>
    %19 = arith.truncf %16 : vector<152x128xf32> to vector<152x128xbf16>
    %cst_16 = arith.constant dense<0.000000e+00> : vector<152x128xf32>
    %20 = tpu.matmul %19, %17, %cst_16 {dimension_numbers = #tpu.dot_dimension_numbers<[1], [0], [0], [1], [0, 0, 1, 1], [], []>} : vector<152x128xbf16>, vector<128x128xbf16>, vector<152x128xf32> -> vector<152x128xf32>
    %21 = vector.broadcast %18 : vector<1x128xf32> to vector<152x128xf32>
    %22 = arith.addf %20, %21 : vector<152x128xf32>
    %cst_17 = arith.constant 0.000000e+00 : f32
    %23 = vector.broadcast %cst_17 : f32 to vector<152x128xf32>
    %24 = arith.maximumf %22, %23 : vector<152x128xf32>
    %c0_18 = arith.constant 0 : index
    %c0_19 = arith.constant 0 : index
    %25 = vector.load %arg8[%c0_18, %c0_19] : memref<1x128xf32, #tpu.memory_space<vmem>>, vector<1x128xf32>
    %26 = vector.broadcast %25 : vector<1x128xf32> to vector<152x128xf32>
    %27 = arith.addf %24, %26 : vector<152x128xf32>
    %cst_20 = arith.constant dense<0xFF800000> : vector<152xf32>
    %28 = vector.multi_reduction <maximumf>, %27, %cst_20 [1] : vector<152x128xf32> to vector<152xf32>
    %29 = vector.shape_cast %28 : vector<152xf32> to vector<152x1xf32>
    %30 = vector.broadcast %29 : vector<152x1xf32> to vector<152x128xf32>
    %31 = arith.subf %27, %30 : vector<152x128xf32>
    %32 = math.exp %31 : vector<152x128xf32>
    %cst_21 = arith.constant dense<0.000000e+00> : vector<152xf32>
    %33 = vector.multi_reduction <add>, %32, %cst_21 [1] : vector<152x128xf32> to vector<152xf32>
    %34 = vector.shape_cast %33 : vector<152xf32> to vector<152x1xf32>
    %35 = math.log %34 : vector<152x1xf32>
    %36 = vector.broadcast %35 : vector<152x1xf32> to vector<152x128xf32>
    %37 = arith.subf %31, %36 : vector<152x128xf32>
    %c0_22 = arith.constant 0 : index
    %c0_23 = arith.constant 0 : index
    %38 = vector.load %arg9[%c0_22, %c0_23] : memref<152x128xf32, #tpu.memory_space<vmem>>, vector<152x128xf32>
    tpu.vector_store %arg9[%c0_22, %c0_23], %37 {strides = array<i32>} : memref<152x128xf32, #tpu.memory_space<vmem>>, vector<152x128xf32>,
    return
  }
  func.func @transform_0(%arg0: i32) -> (i32, i32) {
    %c0_i32 = arith.constant 0 : i32
    %c0_i32_0 = arith.constant 0 : i32
    return %arg0, %c0_i32 : i32, i32
  }
  func.func @transform_1(%arg0: i32) -> (i32, i32) {
    %c0_i32 = arith.constant 0 : i32
    %c0_i32_0 = arith.constant 0 : i32
    %c0_i32_1 = arith.constant 0 : i32
    return %c0_i32, %c0_i32_0 : i32, i32
  }
  func.func @transform_2(%arg0: i32) -> (i32, i32) {
    %c0_i32 = arith.constant 0 : i32
    %c0_i32_0 = arith.constant 0 : i32
    %c0_i32_1 = arith.constant 0 : i32
    return %c0_i32, %c0_i32_0 : i32, i32
  }
  func.func @transform_3(%arg0: i32) -> (i32, i32) {
    %c0_i32 = arith.constant 0 : i32
    %c0_i32_0 = arith.constant 0 : i32
    %c0_i32_1 = arith.constant 0 : i32
    return %c0_i32, %c0_i32_0 : i32, i32
  }
  func.func @transform_4(%arg0: i32) -> (i32, i32) {
    %c0_i32 = arith.constant 0 : i32
    %c0_i32_0 = arith.constant 0 : i32
    %c0_i32_1 = arith.constant 0 : i32
    return %c0_i32, %c0_i32_0 : i32, i32
  }
  func.func @transform_5(%arg0: i32) -> (i32, i32) {
    %c0_i32 = arith.constant 0 : i32
    %c0_i32_0 = arith.constant 0 : i32
    %c0_i32_1 = arith.constant 0 : i32
    return %c0_i32, %c0_i32_0 : i32, i32
  }
  func.func @transform_6(%arg0: i32) -> (i32, i32) {
    %c0_i32 = arith.constant 0 : i32
    %c0_i32_0 = arith.constant 0 : i32
    %c0_i32_1 = arith.constant 0 : i32
    return %c0_i32, %c0_i32_0 : i32, i32
  }
  func.func @transform_7(%arg0: i32) -> (i32, i32) {
    %c0_i32 = arith.constant 0 : i32
    %c0_i32_0 = arith.constant 0 : i32
    %c0_i32_1 = arith.constant 0 : i32
    return %c0_i32, %c0_i32_0 : i32, i32
  }
  func.func @transform_8(%arg0: i32) -> (i32, i32) {
    %c0_i32 = arith.constant 0 : i32
    %c0_i32_0 = arith.constant 0 : i32
    return %arg0, %c0_i32 : i32, i32
  }
}

</mosaic_0001>

<llo_original>
// kernel: mlp_forward.1
$region0: #{mlp_forward.1}
  #allocation0 [shape = 'u32[]', space=smem, size = 0x4, offset = 0x4, fixed_abs, tag = 'smem constant byte address 0x4 - core index']
  #allocation1 [shape = 'u32[72,128]{1,0:T(1,128)}', space=vmem, size = 0x9000, scoped, tag = 'internal scratch']
  %s0 = inlined_call_operand.vmem [shape: f32[304,16], index: 0, kind: input, shape index: {}]
  %s1 = inlined_call_operand.vmem [shape: bf16[16,128], index: 1, kind: input, shape index: {}]
  %s2 = inlined_call_operand.vmem [shape: f32[1,128], index: 2, kind: input, shape index: {}]
  %s3 = inlined_call_operand.vmem [shape: bf16[128,128], index: 3, kind: input, shape index: {}]
  %s4 = inlined_call_operand.vmem [shape: f32[1,128], index: 4, kind: input, shape index: {}]
  %s5 = inlined_call_operand.vmem [shape: bf16[128,128], index: 5, kind: input, shape index: {}]
  %s6 = inlined_call_operand.vmem [shape: f32[1,128], index: 6, kind: input, shape index: {}]
  %s7 = inlined_call_operand.vmem [shape: f32[1,128], index: 7, kind: input, shape index: {}]
  %s8 = inlined_call_operand.vmem [shape: f32[304,128], index: 8, kind: output, shape index: {}]
  %s9 = sld [smem:[#allocation0]]
  $region65: #{mlp_forward.1} parent=0
    _
  %s11 = ssub.s32 1, %s9
  %s12 = scalar_select 0, %s11, %s9
  loop: start=0, step=1, limit=4
  $region2: #{mlp_forward.1} parent=0 // loop_pre_header
    _
  $region3: #{mlp_forward.1} parent=0 // loop_header
    %s14 = sphi 0, %s18
    %p15 = scmp.ge.s32.totalorder %s14, 4
    %s24 = sphi 0, %s26
    %s27 = sphi 0, %s24
    %s28 = sphi 0, %s27
    %s44 = sphi 0, %s28
    %s48 = sphi 0, %s48
    %s50 = sphi 0, %s48
    %s51 = sphi 0, %s50
    %s65 = sphi 0, %s51
    %s69 = sphi 0, %s69
    %s71 = sphi 0, %s69
    %s72 = sphi 0, %s71
    %s86 = sphi 0, %s72
    %s90 = sphi 0, %s90
    %s92 = sphi 0, %s90
    %s93 = sphi 0, %s92
    %s107 = sphi 0, %s93
    %s111 = sphi 0, %s111
    %s113 = sphi 0, %s111
    %s114 = sphi 0, %s113
    %s128 = sphi 0, %s114
    %s132 = sphi 0, %s132
    %s134 = sphi 0, %s132
    %s135 = sphi 0, %s134
    %s149 = sphi 0, %s135
    %s153 = sphi 0, %s153
    %s155 = sphi 0, %s153
    %s156 = sphi 0, %s155
    %s170 = sphi 0, %s156
    %s174 = sphi 0, %s174
    %s176 = sphi 0, %s174
    %s177 = sphi 0, %s176
    %s191 = sphi 0, %s177
    %s197 = sphi 0, %s199
    %s200 = sphi 0, %s197
    %s201 = sphi 0, %s200
    %s217 = sphi 0, %s201
  $region4: #{mlp_forward.1} parent=0 // loop_header_branch
    %17 = sbr.rel (%p15) target = $region8
  $region5: #{mlp_forward.1} parent=0 // loop_body
    %s19 = ssub.s32 %s14, 1
    %s20 = ssub.s32 %s14, 2
    %s21 = sadd.s32 %s14, 1
    %s22 = ssub.s32 %s14, %s21
    %p23 = scmp.eq.s32.totalorder %s22, 0
    %s25 = sadd.s32 %s24, 1
    %s26 = scalar_select %p23, %s24, %s25
    %p29 = pneg %p23
    %p30 = scmp.eq.s32.totalorder %s14, 1
    %p31 = por %p29, %p30
    %p32 = scmp.ne.s32.totalorder %s24, %s27
    %p33 = scmp.eq.s32.totalorder %s14, 0
    %p34 = por %p32, %p33
    %p35 = scmp.ne.s32.totalorder %s24, %s27
    %p36 = scmp.eq.s32.totalorder %s19, 1
    %p37 = por %p35, %p36
    %p38 = scmp.ne.s32.totalorder %s27, %s28
    %p39 = scmp.eq.s32.totalorder %s19, 0
    %p40 = por %p38, %p39
    %p41 = scmp.ne.s32.totalorder %s27, %s28
    %p42 = scmp.eq.s32.totalorder %s20, 1
    %p43 = por %p41, %p42
    %p45 = scmp.ne.s32.totalorder %s28, %s44
    %p46 = scmp.eq.s32.totalorder %s20, 0
    %p47 = por %p45, %p46
    %s49 = sadd.s32 %s48, 1
    %p52 = scmp.eq.s32.totalorder %s14, 1
    %p53 = scmp.ne.s32.totalorder %s48, %s50
    %p54 = scmp.eq.s32.totalorder %s14, 0
    %p55 = por %p53, %p54
    %p56 = scmp.ne.s32.totalorder %s48, %s50
    %p57 = scmp.eq.s32.totalorder %s19, 1
    %p58 = por %p56, %p57
    %p59 = scmp.ne.s32.totalorder %s50, %s51
    %p60 = scmp.eq.s32.totalorder %s19, 0
    %p61 = por %p59, %p60
    %p62 = scmp.ne.s32.totalorder %s50, %s51
    %p63 = scmp.eq.s32.totalorder %s20, 1
    %p64 = por %p62, %p63
    %p66 = scmp.ne.s32.totalorder %s51, %s65
    %p67 = scmp.eq.s32.totalorder %s20, 0
    %p68 = por %p66, %p67
    %s70 = sadd.s32 %s69, 1
    %p73 = scmp.eq.s32.totalorder %s14, 1
    %p74 = scmp.ne.s32.totalorder %s69, %s71
    %p75 = scmp.eq.s32.totalorder %s14, 0
    %p76 = por %p74, %p75
    %p77 = scmp.ne.s32.totalorder %s69, %s71
    %p78 = scmp.eq.s32.totalorder %s19, 1
    %p79 = por %p77, %p78
    %p80 = scmp.ne.s32.totalorder %s71, %s72
    %p81 = scmp.eq.s32.totalorder %s19, 0
    %p82 = por %p80, %p81
    %p83 = scmp.ne.s32.totalorder %s71, %s72
    %p84 = scmp.eq.s32.totalorder %s20, 1
    %p85 = por %p83, %p84
    %p87 = scmp.ne.s32.totalorder %s72, %s86
    %p88 = scmp.eq.s32.totalorder %s20, 0
    %p89 = por %p87, %p88
    %s91 = sadd.s32 %s90, 1
    %p94 = scmp.eq.s32.totalorder %s14, 1
    %p95 = scmp.ne.s32.totalorder %s90, %s92
    %p96 = scmp.eq.s32.totalorder %s14, 0
    %p97 = por %p95, %p96
    %p98 = scmp.ne.s32.totalorder %s90, %s92
    %p99 = scmp.eq.s32.totalorder %s19, 1
    %p100 = por %p98, %p99
    %p101 = scmp.ne.s32.totalorder %s92, %s93
    %p102 = scmp.eq.s32.totalorder %s19, 0
    %p103 = por %p101, %p102
    %p104 = scmp.ne.s32.totalorder %s92, %s93
    %p105 = scmp.eq.s32.totalorder %s20, 1
    %p106 = por %p104, %p105
    %p108 = scmp.ne.s32.totalorder %s93, %s107
    %p109 = scmp.eq.s32.totalorder %s20, 0
    %p110 = por %p108, %p109
    %s112 = sadd.s32 %s111, 1
    %p115 = scmp.eq.s32.totalorder %s14, 1
    %p116 = scmp.ne.s32.totalorder %s111, %s113
    %p117 = scmp.eq.s32.totalorder %s14, 0
    %p118 = por %p116, %p117
    %p119 = scmp.ne.s32.totalorder %s111, %s113
    %p120 = scmp.eq.s32.totalorder %s19, 1
    %p121 = por %p119, %p120
    %p122 = scmp.ne.s32.totalorder %s113, %s114
    %p123 = scmp.eq.s32.totalorder %s19, 0
    %p124 = por %p122, %p123
    %p125 = scmp.ne.s32.totalorder %s113, %s114
    %p126 = scmp.eq.s32.totalorder %s20, 1
    %p127 = por %p125, %p126
    %p129 = scmp.ne.s32.totalorder %s114, %s128
    %p130 = scmp.eq.s32.totalorder %s20, 0
    %p131 = por %p129, %p130
    %s133 = sadd.s32 %s132, 1
    %p136 = scmp.eq.s32.totalorder %s14, 1
    %p137 = scmp.ne.s32.totalorder %s132, %s134
    %p138 = scmp.eq.s32.totalorder %s14, 0
    %p139 = por %p137, %p138
    %p140 = scmp.ne.s32.totalorder %s132, %s134
    %p141 = scmp.eq.s32.totalorder %s19, 1
    %p142 = por %p140, %p141
    %p143 = scmp.ne.s32.totalorder %s134, %s135
    %p144 = scmp.eq.s32.totalorder %s19, 0
    %p145 = por %p143, %p144
    %p146 = scmp.ne.s32.totalorder %s134, %s135
    %p147 = scmp.eq.s32.totalorder %s20, 1
    %p148 = por %p146, %p147
    %p150 = scmp.ne.s32.totalorder %s135, %s149
    %p151 = scmp.eq.s32.totalorder %s20, 0
    %p152 = por %p150, %p151
    %s154 = sadd.s32 %s153, 1
    %p157 = scmp.eq.s32.totalorder %s14, 1
    %p158 = scmp.ne.s32.totalorder %s153, %s155
    %p159 = scmp.eq.s32.totalorder %s14, 0
    %p160 = por %p158, %p159
    %p161 = scmp.ne.s32.totalorder %s153, %s155
    %p162 = scmp.eq.s32.totalorder %s19, 1
    %p163 = por %p161, %p162
    %p164 = scmp.ne.s32.totalorder %s155, %s156
    %p165 = scmp.eq.s32.totalorder %s19, 0
    %p166 = por %p164, %p165
    %p167 = scmp.ne.s32.totalorder %s155, %s156
    %p168 = scmp.eq.s32.totalorder %s20, 1
    %p169 = por %p167, %p168
    %p171 = scmp.ne.s32.totalorder %s156, %s170
    %p172 = scmp.eq.s32.totalorder %s20, 0
    %p173 = por %p171, %p172
    %s175 = sadd.s32 %s174, 1
    %p178 = scmp.eq.s32.totalorder %s14, 1
    %p179 = scmp.ne.s32.totalorder %s174, %s176
    %p180 = scmp.eq.s32.totalorder %s14, 0
    %p181 = por %p179, %p180
    %p182 = scmp.ne.s32.totalorder %s174, %s176
    %p183 = scmp.eq.s32.totalorder %s19, 1
    %p184 = por %p182, %p183
    %p185 = scmp.ne.s32.totalorder %s176, %s177
    %p186 = scmp.eq.s32.totalorder %s19, 0
    %p187 = por %p185, %p186
    %p188 = scmp.ne.s32.totalorder %s176, %s177
    %p189 = scmp.eq.s32.totalorder %s20, 1
    %p190 = por %p188, %p189
    %p192 = scmp.ne.s32.totalorder %s177, %s191
    %p193 = scmp.eq.s32.totalorder %s20, 0
    %p194 = por %p192, %p193
    %s195 = ssub.s32 %s14, %s21
    %p196 = scmp.eq.s32.totalorder %s195, 0
    %s198 = sadd.s32 %s197, 1
    %s199 = scalar_select %p196, %s197, %s198
    %p202 = pneg %p196
    %p203 = scmp.eq.s32.totalorder %s14, 1
    %p204 = por %p202, %p203
    %p205 = scmp.ne.s32.totalorder %s197, %s200
    %p206 = scmp.eq.s32.totalorder %s14, 0
    %p207 = por %p205, %p206
    %p208 = scmp.ne.s32.totalorder %s197, %s200
    %p209 = scmp.eq.s32.totalorder %s19, 1
    %p210 = por %p208, %p209
    %p211 = scmp.ne.s32.totalorder %s200, %s201
    %p212 = scmp.eq.s32.totalorder %s19, 0
    %p213 = por %p211, %p212
    %p214 = scmp.ne.s32.totalorder %s200, %s201
    %p215 = scmp.eq.s32.totalorder %s20, 1
    %p216 = por %p214, %p215
    %p218 = scmp.ne.s32.totalorder %s201, %s217
    %p219 = scmp.eq.s32.totalorder %s20, 0
    %p220 = por %p218, %p219
    %p221 = scmp.le.s32.totalorder 1, %s14
    %p222 = scmp.lt.s32.totalorder %s14, 3
    %p223 = pnand %p221, %p222
    %p224 = pneg %p223
    // Predicated region
    $region9: #{mlp_forward.1} parent=5 // pred_check
      _
    $region10: #{mlp_forward.1} parent=5 // pred_check_branch
      %226 = sbr.rel (%p223) target = $region12
    $region11: #{mlp_forward.1} parent=5 // pred_region
      %s227 = ssub.s32 %s14, 1
      // Predicated region
      $region13: #{mlp_forward.1} parent=11 // pred_check
        %p228 = pneg %p61
      $region14: #{mlp_forward.1} parent=11 // pred_check_branch
        %230 = sbr.rel (%p228) target = $region16
      $region15: #{mlp_forward.1} parent=11 // pred_region
        _
      $region16: #{mlp_forward.1} parent=11 // pred_fallthru
        _
      // Predicated region
      $region17: #{mlp_forward.1} parent=11 // pred_check
        %p231 = pneg %p82
      $region18: #{mlp_forward.1} parent=11 // pred_check_branch
        %233 = sbr.rel (%p231) target = $region20
      $region19: #{mlp_forward.1} parent=11 // pred_region
        _
      $region20: #{mlp_forward.1} parent=11 // pred_fallthru
        _
      // Predicated region
      $region21: #{mlp_forward.1} parent=11 // pred_check
        %p234 = pneg %p103
      $region22: #{mlp_forward.1} parent=11 // pred_check_branch
        %236 = sbr.rel (%p234) target = $region24
      $region23: #{mlp_forward.1} parent=11 // pred_region
        _
      $region24: #{mlp_forward.1} parent=11 // pred_fallthru
        _
      // Predicated region
      $region25: #{mlp_forward.1} parent=11 // pred_check
        %p237 = pneg %p124
      $region26: #{mlp_forward.1} parent=11 // pred_check_branch
        %239 = sbr.rel (%p237) target = $region28
      $region27: #{mlp_forward.1} parent=11 // pred_region
        _
      $region28: #{mlp_forward.1} parent=11 // pred_fallthru
        _
      // Predicated region
      $region29: #{mlp_forward.1} parent=11 // pred_check
        %p240 = pneg %p145
      $region30: #{mlp_forward.1} parent=11 // pred_check_branch
        %242 = sbr.rel (%p240) target = $region32
      $region31: #{mlp_forward.1} parent=11 // pred_region
        _
      $region32: #{mlp_forward.1} parent=11 // pred_fallthru
        _
      // Predicated region
      $region33: #{mlp_forward.1} parent=11 // pred_check
        %p243 = pneg %p166
      $region34: #{mlp_forward.1} parent=11 // pred_check_branch
        %245 = sbr.rel (%p243) target = $region36
      $region35: #{mlp_forward.1} parent=11 // pred_region
        _
      $region36: #{mlp_forward.1} parent=11 // pred_fallthru
        _
      // Predicated region
      $region37: #{mlp_forward.1} parent=11 // pred_check
        %p246 = pneg %p187
      $region38: #{mlp_forward.1} parent=11 // pred_check_branch
        %248 = sbr.rel (%p246) target = $region40
      $region39: #{mlp_forward.1} parent=11 // pred_region
        _
      $region40: #{mlp_forward.1} parent=11 // pred_fallthru
        _
    $region12: #{mlp_forward.1} parent=5 // pred_fallthru
      _
    %p249 = scmp.lt.s32.totalorder %s14, 2
    // Predicated region
    $region41: #{mlp_forward.1} parent=5 // pred_check
      %p250 = pneg %p249
    $region42: #{mlp_forward.1} parent=5 // pred_check_branch
      %252 = sbr.rel (%p250) target = $region44
    $region43: #{mlp_forward.1} parent=5 // pred_region
      // Predicated region
      $region45: #{mlp_forward.1} parent=43 // pred_check
        %p253 = pneg %p34
      $region46: #{mlp_forward.1} parent=43 // pred_check_branch
        %255 = sbr.rel (%p253) target = $region48
      $region47: #{mlp_forward.1} parent=43 // pred_region
        %s256 = smul.u32 19, %s14
        %p257 = scmp.lt.s32.totalorder %s256, 37
        %s258 = scalar_select %p257, %s256, 37
        %s259 = smul.addr %s258, 8
        %s260 = scalar_lea.vmem %s0, %s259
        %s261 = smul.u32 19, %s14
      $region48: #{mlp_forward.1} parent=43 // pred_fallthru
        _
    $region44: #{mlp_forward.1} parent=5 // pred_fallthru
      _
    %p262 = scmp.le.s32.totalorder 1, %s14
    %p263 = scmp.lt.s32.totalorder %s14, 3
    %p264 = pnand %p262, %p263
    %p265 = pneg %p264
    // Predicated region
    $region49: #{mlp_forward.1} parent=5 // pred_check
      _
    $region50: #{mlp_forward.1} parent=5 // pred_check_branch
      %267 = sbr.rel (%p264) target = $region52
    $region51: #{mlp_forward.1} parent=5 // pred_region
      %s268 = ssub.s32 %s14, 1
      %s269 = smul.u32 19, %s19
      %p270 = scmp.lt.s32.totalorder %s269, 37
      %s271 = scalar_select %p270, %s269, 37
      %s272 = smul.addr %s271, 8
      %s273 = scalar_lea.vmem %s0, %s272
      %p274 = pneg %p40
      %p275 = pneg %p37
      %p276 = pneg %p61
      %p277 = pneg %p58
      %p278 = pneg %p82
      %p279 = pneg %p79
      %p280 = pneg %p103
      %p281 = pneg %p100
      %p282 = pneg %p124
      %p283 = pneg %p121
      %p284 = pneg %p145
      %p285 = pneg %p142
      %p286 = pneg %p166
      %p287 = pneg %p163
      %p288 = pneg %p187
      %p289 = pneg %p184
      %p290 = pneg %p213
      %p291 = pneg %p210
      %s292 = smul.u32 19, %s19
      %p293 = scmp.lt.s32.totalorder %s292, 37
      %s294 = scalar_select %p293, %s292, 37
      %s295 = smul.addr %s294, 8
      %s296 = scalar_lea.vmem %s8, %s295
      %s297 = smul.u32 19, %s19
      %p298 = scmp.lt.s32.totalorder %s297, 37
      %s299 = scalar_select %p298, %s297, 37
      %s300 = smul.addr %s299, 8
      %s301 = scalar_lea.vmem %s0, %s300
      %s302 = smul.u32 19, %s19
      %s303 = smul.u32 19, %s19
      %p304 = scmp.lt.s32.totalorder %s303, 37
      %s305 = scalar_select %p304, %s303, 37
      %s306 = smul.addr %s305, 8
      %s307 = scalar_lea.vmem %s8, %s306
      %s308 = smul.u32 19, %s19
      %v310 = vld [vmem:[%s301] sm:$0xff]
      %v311 = vld [vmem:[%s301 + $0x8] sm:$0xff]
      %v312 = vld [vmem:[%s301 + $0x10] sm:$0xff]
      %v313 = vld [vmem:[%s301 + $0x18] sm:$0xff]
      %v314 = vld [vmem:[%s301 + $0x20] sm:$0xff]
      %v315 = vld [vmem:[%s301 + $0x28] sm:$0xff]
      %v316 = vld [vmem:[%s301 + $0x30] sm:$0xff]
      %v317 = vld [vmem:[%s301 + $0x38] sm:$0xff]
      %v318 = vld [vmem:[%s301 + $0x40] sm:$0xff]
      %v319 = vld [vmem:[%s301 + $0x48] sm:$0xff]
      %v320 = vld [vmem:[%s301 + $0x50] sm:$0xff]
      %v321 = vld [vmem:[%s301 + $0x58] sm:$0xff]
      %v322 = vld [vmem:[%s301 + $0x60] sm:$0xff]
      %v323 = vld [vmem:[%s301 + $0x68] sm:$0xff]
      %v324 = vld [vmem:[%s301 + $0x70] sm:$0xff]
      %v325 = vld [vmem:[%s301 + $0x78] sm:$0xff]
      %v326 = vld [vmem:[%s301 + $0x80] sm:$0xff]
      %v327 = vld [vmem:[%s301 + $0x88] sm:$0xff]
      %v328 = vld [vmem:[%s301 + $0x90] sm:$0xff]
      %v329 = vld [vmem:[%s1] sm:$0xf]
      %v330 = vld [vmem:[%s1 + $0x4] sm:$0xf]
      %v331 = vld [vmem:[%s2] sm:$0x1]
      %v332 = vpack.c.bf16 %v311, %v310
      %v333 = vpack.c.bf16 %v313, %v312
      %v334 = vpack.c.bf16 %v315, %v314
      %v335 = vpack.c.bf16 %v317, %v316
      %v336 = vpack.c.bf16 %v319, %v318
      %v337 = vpack.c.bf16 %v321, %v320
      %v338 = vpack.c.bf16 %v323, %v322
      %v339 = vpack.c.bf16 %v325, %v324
      %v340 = vpack.c.bf16 %v327, %v326
      %v341 = vpack.c.bf16 %v328, %v328
      %v343 = vperm.slane %v331, 0
      %v347 = vunpack.c.l.b16 %v329
      %v348 = vunpack.c.l.b16 %v330
      %v349 = vpack.c.b16 %v348, %v347
      %vm351 = vcmask 130048
      %v353 = vsel %vm351, %v332, 0
      %v356 = vsel %vm351, %v333, 0
      %v359 = vsel %vm351, %v334, 0
      %v362 = vsel %vm351, %v335, 0
      %v365 = vsel %vm351, %v336, 0
      %v368 = vsel %vm351, %v337, 0
      %v371 = vsel %vm351, %v338, 0
      %v374 = vsel %vm351, %v339, 0
      %v377 = vsel %vm351, %v340, 0
      %v380 = vsel %vm351, %v341, 0
      %382 = vmatpush.bf16.msra.mxu0 0
      %383 = vmatpush.bf16.msra.mxu0 0
      %384 = vmatpush.bf16.msra.mxu0 0
      %385 = vmatpush.bf16.msra.mxu0 0
      %386 = vmatpush.bf16.msra.mxu0 0
      %387 = vmatpush.bf16.msra.mxu0 0
      %388 = vmatpush.bf16.msra.mxu0 0
      %389 = vmatpush.bf16.msra.mxu0 %v349
      %390 = vmatmul.bf16.gmra.mxu0 %v353
      %v391 = vpop.f32.mrf.mxu0
      %v392 = vadd.f32 %v343, %v391
      %v393 = vpop.f32.mrf.mxu0
      %v394 = vadd.f32 %v343, %v393
      %395 = vmatmul.bf16.gmra.mxu0 %v356
      %v396 = vpop.f32.mrf.mxu0
      %v397 = vadd.f32 %v343, %v396
      %v398 = vpop.f32.mrf.mxu0
      %v399 = vadd.f32 %v343, %v398
      %400 = vmatmul.bf16.gmra.mxu0 %v359
      %v401 = vpop.f32.mrf.mxu0
      %v402 = vadd.f32 %v343, %v401
      %v403 = vpop.f32.mrf.mxu0
      %v404 = vadd.f32 %v343, %v403
      %405 = vmatmul.bf16.gmra.mxu0 %v362
      %v406 = vpop.f32.mrf.mxu0
      %v407 = vadd.f32 %v343, %v406
      %v408 = vpop.f32.mrf.mxu0
      %v409 = vadd.f32 %v343, %v408
      %410 = vmatmul.bf16.gmra.mxu0 %v365
      %v411 = vpop.f32.mrf.mxu0
      %v412 = vadd.f32 %v343, %v411
      %v413 = vpop.f32.mrf.mxu0
      %v414 = vadd.f32 %v343, %v413
      %415 = vmatmul.bf16.gmra.mxu0 %v368
      %v416 = vpop.f32.mrf.mxu0
      %v417 = vadd.f32 %v343, %v416
      %v418 = vpop.f32.mrf.mxu0
      %v419 = vadd.f32 %v343, %v418
      %420 = vmatmul.bf16.gmra.mxu0 %v371
      %v421 = vpop.f32.mrf.mxu0
      %v422 = vadd.f32 %v343, %v421
      %v423 = vpop.f32.mrf.mxu0
      %v424 = vadd.f32 %v343, %v423
      %425 = vmatmul.bf16.gmra.mxu0 %v374
      %v426 = vpop.f32.mrf.mxu0
      %v427 = vadd.f32 %v343, %v426
      %v428 = vpop.f32.mrf.mxu0
      %v429 = vadd.f32 %v343, %v428
      %430 = vmatmul.bf16.gmra.mxu0 %v377
      %v431 = vpop.f32.mrf.mxu0
      %v432 = vadd.f32 %v343, %v431
      %v433 = vpop.f32.mrf.mxu0
      %v434 = vadd.f32 %v343, %v433
      %435 = vmatmul.bf16.gmra.mxu0 %v380
      %v436 = vpop.f32.mrf.mxu0
      %v437 = vadd.f32 %v343, %v436
      %v438 = vpop.f32.mrf.mxu0
      %439 = vdwg.mxu0
      %v440 = vmax.f32 %v392, 0.0
      %v441 = vmax.f32 %v394, 0.0
      %v442 = vmax.f32 %v397, 0.0
      %v443 = vmax.f32 %v399, 0.0
      %v444 = vmax.f32 %v402, 0.0
      %v445 = vmax.f32 %v404, 0.0
      %v446 = vmax.f32 %v407, 0.0
      %v447 = vmax.f32 %v409, 0.0
      %v448 = vmax.f32 %v412, 0.0
      %v449 = vmax.f32 %v414, 0.0
      %v450 = vmax.f32 %v417, 0.0
      %v451 = vmax.f32 %v419, 0.0
      %v452 = vmax.f32 %v422, 0.0
      %v453 = vmax.f32 %v424, 0.0
      %v454 = vmax.f32 %v427, 0.0
      %v455 = vmax.f32 %v429, 0.0
      %v456 = vmax.f32 %v432, 0.0
      %v457 = vmax.f32 %v434, 0.0
      %v458 = vmax.f32 %v437, 0.0
      %v459 = vld [vmem:[%s3] sm:$0xf]
      %v460 = vld [vmem:[%s3 + $0x4] sm:$0xf]
      %v461 = vld [vmem:[%s3 + $0x8] sm:$0xf]
      %v462 = vld [vmem:[%s3 + $0xc] sm:$0xf]
      %v463 = vld [vmem:[%s3 + $0x10] sm:$0xf]
      %v464 = vld [vmem:[%s3 + $0x14] sm:$0xf]
      %v465 = vld [vmem:[%s3 + $0x18] sm:$0xf]
      %v466 = vld [vmem:[%s3 + $0x1c] sm:$0xf]
      %v467 = vld [vmem:[%s3 + $0x20] sm:$0xf]
      %v468 = vld [vmem:[%s3 + $0x24] sm:$0xf]
      %v469 = vld [vmem:[%s3 + $0x28] sm:$0xf]
      %v470 = vld [vmem:[%s3 + $0x2c] sm:$0xf]
      %v471 = vld [vmem:[%s3 + $0x30] sm:$0xf]
      %v472 = vld [vmem:[%s3 + $0x34] sm:$0xf]
      %v473 = vld [vmem:[%s3 + $0x38] sm:$0xf]
      %v474 = vld [vmem:[%s3 + $0x3c] sm:$0xf]
      %v475 = vld [vmem:[%s4] sm:$0x1]
      %v476 = vpack.c.bf16 %v441, %v440
      %v477 = vpack.c.bf16 %v443, %v442
      %v478 = vpack.c.bf16 %v445, %v444
      %v479 = vpack.c.bf16 %v447, %v446
      %v480 = vpack.c.bf16 %v449, %v448
      %v481 = vpack.c.bf16 %v451, %v450
      %v482 = vpack.c.bf16 %v453, %v452
      %v483 = vpack.c.bf16 %v455, %v454
      %v484 = vpack.c.bf16 %v457, %v456
      %v485 = vpack.c.bf16 %v458, %v458
      %v487 = vperm.slane %v475, 0
      %v505 = vunpack.c.l.b16 %v459
      %v506 = vunpack.c.l.b16 %v460
      %v507 = vunpack.c.l.b16 %v461
      %v508 = vunpack.c.l.b16 %v462
      %v509 = vunpack.c.l.b16 %v463
      %v510 = vunpack.c.l.b16 %v464
      %v511 = vunpack.c.l.b16 %v465
      %v512 = vunpack.c.l.b16 %v466
      %v513 = vunpack.c.l.b16 %v467
      %v514 = vunpack.c.l.b16 %v468
      %v515 = vunpack.c.l.b16 %v469
      %v516 = vunpack.c.l.b16 %v470
      %v517 = vunpack.c.l.b16 %v471
      %v518 = vunpack.c.l.b16 %v472
      %v519 = vunpack.c.l.b16 %v473
      %v520 = vunpack.c.l.b16 %v474
      %v521 = vpack.c.b16 %v506, %v505
      %v522 = vpack.c.b16 %v508, %v507
      %v523 = vpack.c.b16 %v510, %v509
      %v524 = vpack.c.b16 %v512, %v511
      %v525 = vpack.c.b16 %v514, %v513
      %v526 = vpack.c.b16 %v516, %v515
      %v527 = vpack.c.b16 %v518, %v517
      %v528 = vpack.c.b16 %v520, %v519
      %537 = vmatpush.bf16.msra.mxu0 %v528
      %538 = vmatpush.bf16.msra.mxu0 %v527
      %539 = vmatpush.bf16.msra.mxu0 %v526
      %540 = vmatpush.bf16.msra.mxu0 %v525
      %541 = vmatpush.bf16.msra.mxu0 %v524
      %542 = vmatpush.bf16.msra.mxu0 %v523
      %543 = vmatpush.bf16.msra.mxu0 %v522
      %544 = vmatpush.bf16.msra.mxu0 %v521
      %545 = vmatmul.bf16.gmra.mxu0 %v476
      %v546 = vpop.f32.mrf.mxu0
      %v547 = vadd.f32 %v487, %v546
      %v548 = vpop.f32.mrf.mxu0
      %v549 = vadd.f32 %v487, %v548
      %550 = vmatmul.bf16.gmra.mxu0 %v477
      %v551 = vpop.f32.mrf.mxu0
      %v552 = vadd.f32 %v487, %v551
      %v553 = vpop.f32.mrf.mxu0
      %v554 = vadd.f32 %v487, %v553
      %555 = vmatmul.bf16.gmra.mxu0 %v478
      %v556 = vpop.f32.mrf.mxu0
      %v557 = vadd.f32 %v487, %v556
      %v558 = vpop.f32.mrf.mxu0
      %v559 = vadd.f32 %v487, %v558
      %560 = vmatmul.bf16.gmra.mxu0 %v479
      %v561 = vpop.f32.mrf.mxu0
      %v562 = vadd.f32 %v487, %v561
      %v563 = vpop.f32.mrf.mxu0
      %v564 = vadd.f32 %v487, %v563
      %565 = vmatmul.bf16.gmra.mxu0 %v480
      %v566 = vpop.f32.mrf.mxu0
      %v567 = vadd.f32 %v487, %v566
      %v568 = vpop.f32.mrf.mxu0
      %v569 = vadd.f32 %v487, %v568
      %570 = vmatmul.bf16.gmra.mxu0 %v481
      %v571 = vpop.f32.mrf.mxu0
      %v572 = vadd.f32 %v487, %v571
      %v573 = vpop.f32.mrf.mxu0
      %v574 = vadd.f32 %v487, %v573
      %575 = vmatmul.bf16.gmra.mxu0 %v482
      %v576 = vpop.f32.mrf.mxu0
      %v577 = vadd.f32 %v487, %v576
      %v578 = vpop.f32.mrf.mxu0
      %v579 = vadd.f32 %v487, %v578
      %580 = vmatmul.bf16.gmra.mxu0 %v483
      %v581 = vpop.f32.mrf.mxu0
      %v582 = vadd.f32 %v487, %v581
      %v583 = vpop.f32.mrf.mxu0
      %v584 = vadd.f32 %v487, %v583
      %585 = vmatmul.bf16.gmra.mxu0 %v484
      %v586 = vpop.f32.mrf.mxu0
      %v587 = vadd.f32 %v487, %v586
      %v588 = vpop.f32.mrf.mxu0
      %v589 = vadd.f32 %v487, %v588
      %590 = vmatmul.bf16.gmra.mxu0 %v485
      %v591 = vpop.f32.mrf.mxu0
      %v592 = vadd.f32 %v487, %v591
      %v593 = vpop.f32.mrf.mxu0
      %594 = vdwg.mxu0
      %v595 = vmax.f32 %v547, 0.0
      %v596 = vmax.f32 %v549, 0.0
      %v597 = vmax.f32 %v552, 0.0
      %v598 = vmax.f32 %v554, 0.0
      %v599 = vmax.f32 %v557, 0.0
      %v600 = vmax.f32 %v559, 0.0
      %v601 = vmax.f32 %v562, 0.0
      %v602 = vmax.f32 %v564, 0.0
      %v603 = vmax.f32 %v567, 0.0
      %v604 = vmax.f32 %v569, 0.0
      %v605 = vmax.f32 %v572, 0.0
      %v606 = vmax.f32 %v574, 0.0
      %v607 = vmax.f32 %v577, 0.0
      %v608 = vmax.f32 %v579, 0.0
      %v609 = vmax.f32 %v582, 0.0
      %v610 = vmax.f32 %v584, 0.0
      %v611 = vmax.f32 %v587, 0.0
      %v612 = vmax.f32 %v589, 0.0
      %v613 = vmax.f32 %v592, 0.0
      %v614 = vld [vmem:[%s5] sm:$0xf]
      %v615 = vld [vmem:[%s5 + $0x4] sm:$0xf]
      %v616 = vld [vmem:[%s5 + $0x8] sm:$0xf]
      %v617 = vld [vmem:[%s5 + $0xc] sm:$0xf]
      %v618 = vld [vmem:[%s5 + $0x10] sm:$0xf]
      %v619 = vld [vmem:[%s5 + $0x14] sm:$0xf]
      %v620 = vld [vmem:[%s5 + $0x18] sm:$0xf]
      %v621 = vld [vmem:[%s5 + $0x1c] sm:$0xf]
      %v622 = vld [vmem:[%s5 + $0x20] sm:$0xf]
      %v623 = vld [vmem:[%s5 + $0x24] sm:$0xf]
      %v624 = vld [vmem:[%s5 + $0x28] sm:$0xf]
      %v625 = vld [vmem:[%s5 + $0x2c] sm:$0xf]
      %v626 = vld [vmem:[%s5 + $0x30] sm:$0xf]
      %v627 = vld [vmem:[%s5 + $0x34] sm:$0xf]
      %v628 = vld [vmem:[%s5 + $0x38] sm:$0xf]
      %v629 = vld [vmem:[%s5 + $0x3c] sm:$0xf]
      %v630 = vld [vmem:[%s6] sm:$0x1]
      %v631 = vpack.c.bf16 %v596, %v595
      %v632 = vpack.c.bf16 %v598, %v597
      %v633 = vpack.c.bf16 %v600, %v599
      %v634 = vpack.c.bf16 %v602, %v601
      %v635 = vpack.c.bf16 %v604, %v603
      %v636 = vpack.c.bf16 %v606, %v605
      %v637 = vpack.c.bf16 %v608, %v607
      %v638 = vpack.c.bf16 %v610, %v609
      %v639 = vpack.c.bf16 %v612, %v611
      %v640 = vpack.c.bf16 %v613, %v613
      %v642 = vperm.slane %v630, 0
      %v660 = vunpack.c.l.b16 %v614
      %v661 = vunpack.c.l.b16 %v615
      %v662 = vunpack.c.l.b16 %v616
      %v663 = vunpack.c.l.b16 %v617
      %v664 = vunpack.c.l.b16 %v618
      %v665 = vunpack.c.l.b16 %v619
      %v666 = vunpack.c.l.b16 %v620
      %v667 = vunpack.c.l.b16 %v621
      %v668 = vunpack.c.l.b16 %v622
      %v669 = vunpack.c.l.b16 %v623
      %v670 = vunpack.c.l.b16 %v624
      %v671 = vunpack.c.l.b16 %v625
      %v672 = vunpack.c.l.b16 %v626
      %v673 = vunpack.c.l.b16 %v627
      %v674 = vunpack.c.l.b16 %v628
      %v675 = vunpack.c.l.b16 %v629
      %v676 = vpack.c.b16 %v661, %v660
      %v677 = vpack.c.b16 %v663, %v662
      %v678 = vpack.c.b16 %v665, %v664
      %v679 = vpack.c.b16 %v667, %v666
      %v680 = vpack.c.b16 %v669, %v668
      %v681 = vpack.c.b16 %v671, %v670
      %v682 = vpack.c.b16 %v673, %v672
      %v683 = vpack.c.b16 %v675, %v674
      %692 = vmatpush.bf16.msra.mxu0 %v683
      %693 = vmatpush.bf16.msra.mxu0 %v682
      %694 = vmatpush.bf16.msra.mxu0 %v681
      %695 = vmatpush.bf16.msra.mxu0 %v680
      %696 = vmatpush.bf16.msra.mxu0 %v679
      %697 = vmatpush.bf16.msra.mxu0 %v678
      %698 = vmatpush.bf16.msra.mxu0 %v677
      %699 = vmatpush.bf16.msra.mxu0 %v676
      %700 = vmatmul.bf16.gmra.mxu0 %v631
      %v701 = vpop.f32.mrf.mxu0
      %v702 = vadd.f32 %v642, %v701
      %v703 = vpop.f32.mrf.mxu0
      %v704 = vadd.f32 %v642, %v703
      %705 = vmatmul.bf16.gmra.mxu0 %v632
      %v706 = vpop.f32.mrf.mxu0
      %v707 = vadd.f32 %v642, %v706
      %v708 = vpop.f32.mrf.mxu0
      %v709 = vadd.f32 %v642, %v708
      %710 = vmatmul.bf16.gmra.mxu0 %v633
      %v711 = vpop.f32.mrf.mxu0
      %v712 = vadd.f32 %v642, %v711
      %v713 = vpop.f32.mrf.mxu0
      %v714 = vadd.f32 %v642, %v713
      %715 = vmatmul.bf16.gmra.mxu0 %v634
      %v716 = vpop.f32.mrf.mxu0
      %v717 = vadd.f32 %v642, %v716
      %v718 = vpop.f32.mrf.mxu0
      %v719 = vadd.f32 %v642, %v718
      %720 = vmatmul.bf16.gmra.mxu0 %v635
      %v721 = vpop.f32.mrf.mxu0
      %v722 = vadd.f32 %v642, %v721
      %v723 = vpop.f32.mrf.mxu0
      %v724 = vadd.f32 %v642, %v723
      %725 = vmatmul.bf16.gmra.mxu0 %v636
      %v726 = vpop.f32.mrf.mxu0
      %v727 = vadd.f32 %v642, %v726
      %v728 = vpop.f32.mrf.mxu0
      %v729 = vadd.f32 %v642, %v728
      %730 = vmatmul.bf16.gmra.mxu0 %v637
      %v731 = vpop.f32.mrf.mxu0
      %v732 = vadd.f32 %v642, %v731
      %v733 = vpop.f32.mrf.mxu0
      %v734 = vadd.f32 %v642, %v733
      %735 = vmatmul.bf16.gmra.mxu0 %v638
      %v736 = vpop.f32.mrf.mxu0
      %v737 = vadd.f32 %v642, %v736
      %v738 = vpop.f32.mrf.mxu0
      %v739 = vadd.f32 %v642, %v738
      %740 = vmatmul.bf16.gmra.mxu0 %v639
      %v741 = vpop.f32.mrf.mxu0
      %v742 = vadd.f32 %v642, %v741
      %v743 = vpop.f32.mrf.mxu0
      %v744 = vadd.f32 %v642, %v743
      %745 = vmatmul.bf16.gmra.mxu0 %v640
      %v746 = vpop.f32.mrf.mxu0
      %v747 = vadd.f32 %v642, %v746
      %v748 = vpop.f32.mrf.mxu0
      %749 = vdwg.mxu0
      %v750 = vmax.f32 %v702, 0.0
      %v751 = vmax.f32 %v704, 0.0
      %v752 = vmax.f32 %v707, 0.0
      %v753 = vmax.f32 %v709, 0.0
      %v754 = vmax.f32 %v712, 0.0
      %v755 = vmax.f32 %v714, 0.0
      %v756 = vmax.f32 %v717, 0.0
      %v757 = vmax.f32 %v719, 0.0
      %v758 = vmax.f32 %v722, 0.0
      %v759 = vmax.f32 %v724, 0.0
      %v760 = vmax.f32 %v727, 0.0
      %v761 = vmax.f32 %v729, 0.0
      %v762 = vmax.f32 %v732, 0.0
      %v763 = vmax.f32 %v734, 0.0
      %v764 = vmax.f32 %v737, 0.0
      %v765 = vmax.f32 %v739, 0.0
      %v766 = vmax.f32 %v742, 0.0
      %v767 = vmax.f32 %v744, 0.0
      %v768 = vmax.f32 %v747, 0.0
      %v769 = vld [vmem:[%s7] sm:$0x1]
      %v771 = vperm.slane %v769, 0
      %v773 = vadd.f32 %v750, %v771
      %v774 = vadd.f32 %v751, %v771
      %v775 = vadd.f32 %v752, %v771
      %v776 = vadd.f32 %v753, %v771
      %v777 = vadd.f32 %v754, %v771
      %v778 = vadd.f32 %v755, %v771
      %v779 = vadd.f32 %v756, %v771
      %v780 = vadd.f32 %v757, %v771
      %v781 = vadd.f32 %v758, %v771
      %v782 = vadd.f32 %v759, %v771
      %v783 = vadd.f32 %v760, %v771
      %v784 = vadd.f32 %v761, %v771
      %v785 = vadd.f32 %v762, %v771
      %v786 = vadd.f32 %v763, %v771
      %v787 = vadd.f32 %v764, %v771
      %v788 = vadd.f32 %v765, %v771
      %v789 = vadd.f32 %v766, %v771
      %v790 = vadd.f32 %v767, %v771
      %v791 = vadd.f32 %v768, %v771
      %792 = vmax.xlane.f32.xlu0 %v773
      %v793 = vpop.xlane.xlu0 %792
      %794 = vmax.xlane.f32.xlu0 %v774
      %v795 = vpop.xlane.xlu0 %794
      %796 = vmax.xlane.f32.xlu0 %v775
      %v797 = vpop.xlane.xlu0 %796
      %798 = vmax.xlane.f32.xlu0 %v776
      %v799 = vpop.xlane.xlu0 %798
      %800 = vmax.xlane.f32.xlu0 %v777
      %v801 = vpop.xlane.xlu0 %800
      %802 = vmax.xlane.f32.xlu0 %v778
      %v803 = vpop.xlane.xlu0 %802
      %804 = vmax.xlane.f32.xlu0 %v779
      %v805 = vpop.xlane.xlu0 %804
      %806 = vmax.xlane.f32.xlu0 %v780
      %v807 = vpop.xlane.xlu0 %806
      %808 = vmax.xlane.f32.xlu0 %v781
      %v809 = vpop.xlane.xlu0 %808
      %810 = vmax.xlane.f32.xlu0 %v782
      %v811 = vpop.xlane.xlu0 %810
      %812 = vmax.xlane.f32.xlu0 %v783
      %v813 = vpop.xlane.xlu0 %812
      %814 = vmax.xlane.f32.xlu0 %v784
      %v815 = vpop.xlane.xlu0 %814
      %816 = vmax.xlane.f32.xlu0 %v785
      %v817 = vpop.xlane.xlu0 %816
      %818 = vmax.xlane.f32.xlu0 %v786
      %v819 = vpop.xlane.xlu0 %818
      %820 = vmax.xlane.f32.xlu0 %v787
      %v821 = vpop.xlane.xlu0 %820
      %822 = vmax.xlane.f32.xlu0 %v788
      %v823 = vpop.xlane.xlu0 %822
      %824 = vmax.xlane.f32.xlu0 %v789
      %v825 = vpop.xlane.xlu0 %824
      %826 = vmax.xlane.f32.xlu0 %v790
      %v827 = vpop.xlane.xlu0 %826
      %828 = vmax.xlane.f32.xlu0 %v791
      %v829 = vpop.xlane.xlu0 %828
      %v830 = vsub.f32 %v773, %v793
      %v831 = vsub.f32 %v774, %v795
      %v832 = vsub.f32 %v775, %v797
      %v833 = vsub.f32 %v776, %v799
      %v834 = vsub.f32 %v777, %v801
      %v835 = vsub.f32 %v778, %v803
      %v836 = vsub.f32 %v779, %v805
      %v837 = vsub.f32 %v780, %v807
      %v838 = vsub.f32 %v781, %v809
      %v839 = vsub.f32 %v782, %v811
      %v840 = vsub.f32 %v783, %v813
      %v841 = vsub.f32 %v784, %v815
      %v842 = vsub.f32 %v785, %v817
      %v843 = vsub.f32 %v786, %v819
      %v844 = vsub.f32 %v787, %v821
      %v845 = vsub.f32 %v788, %v823
      %v846 = vsub.f32 %v789, %v825
      %v847 = vsub.f32 %v790, %v827
      %v848 = vsub.f32 %v791, %v829
      %v849 = vmul.f32 %v830, 1.442695
      %v850 = vpow.pop %v849
      %v851 = vmul.f32 %v831, 1.442695
      %v852 = vpow.pop %v851
      %v853 = vmul.f32 %v832, 1.442695
      %v854 = vpow.pop %v853
      %v855 = vmul.f32 %v833, 1.442695
      %v856 = vpow.pop %v855
      %v857 = vmul.f32 %v834, 1.442695
      %v858 = vpow.pop %v857
      %v859 = vmul.f32 %v835, 1.442695
      %v860 = vpow.pop %v859
      %v861 = vmul.f32 %v836, 1.442695
      %v862 = vpow.pop %v861
      %v863 = vmul.f32 %v837, 1.442695
      %v864 = vpow.pop %v863
      %v865 = vmul.f32 %v838, 1.442695
      %v866 = vpow.pop %v865
      %v867 = vmul.f32 %v839, 1.442695
      %v868 = vpow.pop %v867
      %v869 = vmul.f32 %v840, 1.442695
      %v870 = vpow.pop %v869
      %v871 = vmul.f32 %v841, 1.442695
      %v872 = vpow.pop %v871
      %v873 = vmul.f32 %v842, 1.442695
      %v874 = vpow.pop %v873
      %v875 = vmul.f32 %v843, 1.442695
      %v876 = vpow.pop %v875
      %v877 = vmul.f32 %v844, 1.442695
      %v878 = vpow.pop %v877
      %v879 = vmul.f32 %v845, 1.442695
      %v880 = vpow.pop %v879
      %v881 = vmul.f32 %v846, 1.442695
      %v882 = vpow.pop %v881
      %v883 = vmul.f32 %v847, 1.442695
      %v884 = vpow.pop %v883
      %v885 = vmul.f32 %v848, 1.442695
      %v886 = vpow.pop %v885
      %887 = vadd.xlane.f32.xlu0 %v850
      %v888 = vpop.xlane.xlu0 %887
      %889 = vadd.xlane.f32.xlu0 %v852
      %v890 = vpop.xlane.xlu0 %889
      %891 = vadd.xlane.f32.xlu0 %v854
      %v892 = vpop.xlane.xlu0 %891
      %893 = vadd.xlane.f32.xlu0 %v856
      %v894 = vpop.xlane.xlu0 %893
      %895 = vadd.xlane.f32.xlu0 %v858
      %v896 = vpop.xlane.xlu0 %895
      %897 = vadd.xlane.f32.xlu0 %v860
      %v898 = vpop.xlane.xlu0 %897
      %899 = vadd.xlane.f32.xlu0 %v862
      %v900 = vpop.xlane.xlu0 %899
      %901 = vadd.xlane.f32.xlu0 %v864
      %v902 = vpop.xlane.xlu0 %901
      %903 = vadd.xlane.f32.xlu0 %v866
      %v904 = vpop.xlane.xlu0 %903
      %905 = vadd.xlane.f32.xlu0 %v868
      %v906 = vpop.xlane.xlu0 %905
      %907 = vadd.xlane.f32.xlu0 %v870
      %v908 = vpop.xlane.xlu0 %907
      %909 = vadd.xlane.f32.xlu0 %v872
      %v910 = vpop.xlane.xlu0 %909
      %911 = vadd.xlane.f32.xlu0 %v874
      %v912 = vpop.xlane.xlu0 %911
      %913 = vadd.xlane.f32.xlu0 %v876
      %v914 = vpop.xlane.xlu0 %913
      %915 = vadd.xlane.f32.xlu0 %v878
      %v916 = vpop.xlane.xlu0 %915
      %917 = vadd.xlane.f32.xlu0 %v880
      %v918 = vpop.xlane.xlu0 %917
      %919 = vadd.xlane.f32.xlu0 %v882
      %v920 = vpop.xlane.xlu0 %919
      %921 = vadd.xlane.f32.xlu0 %v884
      %v922 = vpop.xlane.xlu0 %921
      %923 = vadd.xlane.f32.xlu0 %v886
      %v924 = vpop.xlane.xlu0 %923
      %v925 = vlog2.pop %v888
      %v926 = vmul.f32 %v925, 0.6931472
      %v927 = vlog2.pop %v890
      %v928 = vmul.f32 %v927, 0.6931472
      %v929 = vlog2.pop %v892
      %v930 = vmul.f32 %v929, 0.6931472
      %v931 = vlog2.pop %v894
      %v932 = vmul.f32 %v931, 0.6931472
      %v933 = vlog2.pop %v896
      %v934 = vmul.f32 %v933, 0.6931472
      %v935 = vlog2.pop %v898
      %v936 = vmul.f32 %v935, 0.6931472
      %v937 = vlog2.pop %v900
      %v938 = vmul.f32 %v937, 0.6931472
      %v939 = vlog2.pop %v902
      %v940 = vmul.f32 %v939, 0.6931472
      %v941 = vlog2.pop %v904
      %v942 = vmul.f32 %v941, 0.6931472
      %v943 = vlog2.pop %v906
      %v944 = vmul.f32 %v943, 0.6931472
      %v945 = vlog2.pop %v908
      %v946 = vmul.f32 %v945, 0.6931472
      %v947 = vlog2.pop %v910
      %v948 = vmul.f32 %v947, 0.6931472
      %v949 = vlog2.pop %v912
      %v950 = vmul.f32 %v949, 0.6931472
      %v951 = vlog2.pop %v914
      %v952 = vmul.f32 %v951, 0.6931472
      %v953 = vlog2.pop %v916
      %v954 = vmul.f32 %v953, 0.6931472
      %v955 = vlog2.pop %v918
      %v956 = vmul.f32 %v955, 0.6931472
      %v957 = vlog2.pop %v920
      %v958 = vmul.f32 %v957, 0.6931472
      %v959 = vlog2.pop %v922
      %v960 = vmul.f32 %v959, 0.6931472
      %v961 = vlog2.pop %v924
      %v962 = vmul.f32 %v961, 0.6931472
      %v963 = vsub.f32 %v830, %v926
      %v964 = vsub.f32 %v831, %v928
      %v965 = vsub.f32 %v832, %v930
      %v966 = vsub.f32 %v833, %v932
      %v967 = vsub.f32 %v834, %v934
      %v968 = vsub.f32 %v835, %v936
      %v969 = vsub.f32 %v836, %v938
      %v970 = vsub.f32 %v837, %v940
      %v971 = vsub.f32 %v838, %v942
      %v972 = vsub.f32 %v839, %v944
      %v973 = vsub.f32 %v840, %v946
      %v974 = vsub.f32 %v841, %v948
      %v975 = vsub.f32 %v842, %v950
      %v976 = vsub.f32 %v843, %v952
      %v977 = vsub.f32 %v844, %v954
      %v978 = vsub.f32 %v845, %v956
      %v979 = vsub.f32 %v846, %v958
      %v980 = vsub.f32 %v847, %v960
      %v981 = vsub.f32 %v848, %v962
      %982 = vst [vmem:[%s307] sm:$0xff] %v963
      %983 = vst [vmem:[%s307 + $0x8] sm:$0xff] %v964
      %984 = vst [vmem:[%s307 + $0x10] sm:$0xff] %v965
      %985 = vst [vmem:[%s307 + $0x18] sm:$0xff] %v966
      %986 = vst [vmem:[%s307 + $0x20] sm:$0xff] %v967
      %987 = vst [vmem:[%s307 + $0x28] sm:$0xff] %v968
      %988 = vst [vmem:[%s307 + $0x30] sm:$0xff] %v969
      %989 = vst [vmem:[%s307 + $0x38] sm:$0xff] %v970
      %990 = vst [vmem:[%s307 + $0x40] sm:$0xff] %v971
      %991 = vst [vmem:[%s307 + $0x48] sm:$0xff] %v972
      %992 = vst [vmem:[%s307 + $0x50] sm:$0xff] %v973
      %993 = vst [vmem:[%s307 + $0x58] sm:$0xff] %v974
      %994 = vst [vmem:[%s307 + $0x60] sm:$0xff] %v975
      %995 = vst [vmem:[%s307 + $0x68] sm:$0xff] %v976
      %996 = vst [vmem:[%s307 + $0x70] sm:$0xff] %v977
      %997 = vst [vmem:[%s307 + $0x78] sm:$0xff] %v978
      %998 = vst [vmem:[%s307 + $0x80] sm:$0xff] %v979
      %999 = vst [vmem:[%s307 + $0x88] sm:$0xff] %v980
      %1000 = vst [vmem:[%s307 + $0x90] sm:$0xff] %v981
      %s1001 = smul.u32 19, %s19
      %p1002 = scmp.lt.s32.totalorder %s1001, 37
      %s1003 = scalar_select %p1002, %s1001, 37
      %s1004 = smul.addr %s1003, 8
      %s1005 = scalar_lea.vmem %s8, %s1004
      // Predicated region
      $region53: #{mlp_forward.1} parent=51 // pred_check
        %p1006 = pneg %p210
      $region54: #{mlp_forward.1} parent=51 // pred_check_branch
        %1008 = sbr.rel (%p1006) target = $region56
      $region55: #{mlp_forward.1} parent=51 // pred_region
        %s1009 = smul.u32 19, %s19
      $region56: #{mlp_forward.1} parent=51 // pred_fallthru
        _
    $region52: #{mlp_forward.1} parent=5 // pred_fallthru
      _
    %p1010 = scmp.le.s32.totalorder 2, %s14
    // Predicated region
    $region57: #{mlp_forward.1} parent=5 // pred_check
      %p1011 = pneg %p1010
    $region58: #{mlp_forward.1} parent=5 // pred_check_branch
      %1013 = sbr.rel (%p1011) target = $region60
    $region59: #{mlp_forward.1} parent=5 // pred_region
      %s1014 = ssub.s32 %s14, 2
      // Predicated region
      $region61: #{mlp_forward.1} parent=59 // pred_check
        %p1015 = pneg %p216
      $region62: #{mlp_forward.1} parent=59 // pred_check_branch
        %1017 = sbr.rel (%p1015) target = $region64
      $region63: #{mlp_forward.1} parent=59 // pred_region
        %s1018 = smul.u32 19, %s20
        %p1019 = scmp.lt.s32.totalorder %s1018, 37
        %s1020 = scalar_select %p1019, %s1018, 37
        %s1021 = smul.addr %s1020, 8
        %s1022 = scalar_lea.vmem %s8, %s1021
      $region64: #{mlp_forward.1} parent=59 // pred_fallthru
        _
    $region60: #{mlp_forward.1} parent=5 // pred_fallthru
      _
  $region6: #{mlp_forward.1} parent=0 // loop_footer
    %s18 = sadd.s32 1, %s14
  $region7: #{mlp_forward.1} parent=0 // loop_footer_branch
    %13 = sbr.rel target = $region3
  $region8: #{mlp_forward.1} parent=0 // loop_exit
    _

</llo_original>
